<compile_context>
chip_gen: v7x
topology: tpu7x:2x2x1
jax: 0.10.0
libtpu: 0.0.40
codegen_flags: <defaults>
</compile_context>

<pallas_src>
import numpy as np

import jax
import jax.numpy as jnp
from jax.experimental import pallas as pl
from jax.experimental.pallas import tpu as pltpu

N_FEATURES = 90
N_CLASSES = 10
HIDDEN = 256

N_PAD = 128  # padded class dim -> lane-dense, unmasked output stores


def _round_up(x, m):
    return ((x + m - 1) // m) * m


def _choose_tile_b(B):
    """Adaptive batch tile.

    * B <= 256: one tile of exactly B rows (block dim == full array dim satisfies the
      layout rule for any B; no wasted rows for tiny batches).
    * larger B: tiles of up to 1024 rows, chosen so the grid has >= 2 steps so both
      v7x TensorCores get work, while amortizing per-grid-step overhead.
    """
    if B <= 256:
        return B
    return min(1024, _round_up(pl.cdiv(B, 2), 256))


def mlp_kernel(x_ref, w1_ref, b1_ref, w2_ref, b2_ref, w3_ref, b3_ref, o_ref):
    # layer_1 + Identity norm + ReLU (K=90 contraction; Mosaic pads internally)
    x = x_ref[...].astype(jnp.bfloat16)
    h1 = jnp.dot(x, w1_ref[...], preferred_element_type=jnp.float32)
    h1 = jnp.maximum(h1 + b1_ref[...], 0.0)

    # layer_2 + Identity norm + ReLU
    h2 = jnp.dot(h1.astype(jnp.bfloat16), w2_ref[...],
                 preferred_element_type=jnp.float32)
    h2 = jnp.maximum(h2 + b2_ref[...], 0.0)

    # output_layer (no activation); padded class columns carry zero weight/bias
    out = jnp.dot(h2.astype(jnp.bfloat16), w3_ref[...],
                  preferred_element_type=jnp.float32)
    o_ref[...] = (out + b3_ref[...]).astype(o_ref.dtype)


def prepare_params(w1, b1, w2, b2, w3, b3):
    """One-time weight/bias prep (hoisted out of the per-call forward).

    bf16 casts for the matmul operands, class-dim padding of w3/b3 to 128 lanes.
    """
    w1_b = jnp.asarray(w1, jnp.bfloat16)                                   # (90, 256)
    w2_b = jnp.asarray(w2, jnp.bfloat16)                                   # (256, 256)
    w3_p = jnp.zeros((HIDDEN, N_PAD), jnp.bfloat16)
    w3_p = w3_p.at[:, :N_CLASSES].set(jnp.asarray(w3, jnp.bfloat16))       # (256, 128)

    b1_p = jnp.asarray(b1, jnp.float32).reshape(1, HIDDEN)
    b2_p = jnp.asarray(b2, jnp.float32).reshape(1, HIDDEN)
    b3_p = jnp.zeros((1, N_PAD), jnp.float32)
    b3_p = b3_p.at[0, :N_CLASSES].set(jnp.asarray(b3, jnp.float32))
    return (w1_b, b1_p, w2_b, b2_p, w3_p, b3_p)


@jax.jit
def model_2_forward(x, prepared):
    """x: (B, 90) float32. Returns (B, 10) float32 logits."""
    w1_b, b1_p, w2_b, b2_p, w3_p, b3_p = prepared
    B = x.shape[0]
    tile_b = _choose_tile_b(B)
    n_tiles = pl.cdiv(B, tile_b)

    flops = 2 * B * (N_FEATURES * HIDDEN + HIDDEN * HIDDEN + HIDDEN * N_PAD)
    bytes_accessed = (
        x.size * x.dtype.itemsize
        + (w1_b.size + w2_b.size + w3_p.size) * 2
        + (b1_p.size + b2_p.size + b3_p.size) * 4
        + B * N_PAD * 4
    )

    out_padded = pl.pallas_call(
        mlp_kernel,
        out_shape=jax.ShapeDtypeStruct((B, N_PAD), jnp.float32),
        grid=(n_tiles,),
        in_specs=[
            # x tile, streamed per grid step, fed raw (no wrapper pad/cast)
            pl.BlockSpec((tile_b, N_FEATURES), lambda i: (i, 0)),
            # weights / biases: constant index maps -> VMEM-resident across steps
            pl.BlockSpec((N_FEATURES, HIDDEN), lambda i: (0, 0)),   # w1
            pl.BlockSpec((1, HIDDEN), lambda i: (0, 0)),            # b1
            pl.BlockSpec((HIDDEN, HIDDEN), lambda i: (0, 0)),       # w2
            pl.BlockSpec((1, HIDDEN), lambda i: (0, 0)),            # b2
            pl.BlockSpec((HIDDEN, N_PAD), lambda i: (0, 0)),        # w3 (class-padded)
            pl.BlockSpec((1, N_PAD), lambda i: (0, 0)),             # b3 (class-padded)
        ],
        out_specs=pl.BlockSpec((tile_b, N_PAD), lambda i: (i, 0)),
        compiler_params=pltpu.CompilerParams(
            dimension_semantics=("parallel",),
        ),
        cost_estimate=pl.CostEstimate(
            flops=flops, transcendentals=0, bytes_accessed=bytes_accessed
        ),
    )(x, w1_b, b1_p, w2_b, b2_p, w3_p, b3_p)

    return out_padded[:, :N_CLASSES]


def init_params(key):
    """Deterministic init mimicking PyTorch's default Linear init (uniform +-1/sqrt(fan_in))."""
    ks = jax.random.split(key, 6)

    def lin(kw, kb, fan_in, fan_out):
        bound = 1.0 / np.sqrt(fan_in)
        w = jax.random.uniform(kw, (fan_in, fan_out), jnp.float32, -bound, bound)
        b = jax.random.uniform(kb, (fan_out,), jnp.float32, -bound, bound)
        return w, b

    w1, b1 = lin(ks[0], ks[1], N_FEATURES, HIDDEN)
    w2, b2 = lin(ks[2], ks[3], HIDDEN, HIDDEN)
    w3, b3 = lin(ks[4], ks[5], HIDDEN, N_CLASSES)
    return w1, b1, w2, b2, w3, b3


def _ref_bf16_path(x, params):
    """Plain-JAX reference with the same bf16-operand / f32-accumulate precision."""
    w1, b1, w2, b2, w3, b3 = params
    h = jnp.maximum(
        jnp.dot(x.astype(jnp.bfloat16), w1.astype(jnp.bfloat16),
                preferred_element_type=jnp.float32) + b1, 0.0)
    h = jnp.maximum(
        jnp.dot(h.astype(jnp.bfloat16), w2.astype(jnp.bfloat16),
                preferred_element_type=jnp.float32) + b2, 0.0)
    return jnp.dot(h.astype(jnp.bfloat16), w3.astype(jnp.bfloat16),
                   preferred_element_type=jnp.float32) + b3


if __name__ == "__main__":
    key = jax.random.PRNGKey(0)
    k_x, k_p, k_x2 = jax.random.split(key, 3)

    params = init_params(k_p)
    prepared = prepare_params(*params)   # one-time padding / casts

    # small batch: single right-sized tile (no padded rows)
    batch = 8
    x = jax.random.normal(k_x, (batch, N_FEATURES), dtype=jnp.float32)
    out = jax.block_until_ready(model_2_forward(x, prepared))
    assert out.shape == (batch, N_CLASSES)
    np.testing.assert_allclose(
        np.asarray(out), np.asarray(_ref_bf16_path(x, params)), rtol=2e-2, atol=2e-2)

    # larger batch: exercises the multi-step "parallel" grid path (2 tiles of 256)
    x2 = jax.random.normal(k_x2, (512, N_FEATURES), dtype=jnp.float32)
    out2 = jax.block_until_ready(model_2_forward(x2, prepared))
    assert out2.shape == (512, N_CLASSES)
    np.testing.assert_allclose(
        np.asarray(out2), np.asarray(_ref_bf16_path(x2, params)), rtol=2e-2, atol=2e-2)

    # loose semantic check against the full-f32 PyTorch-equivalent forward
    w1, b1, w2, b2, w3, b3 = params
    ref32 = jnp.maximum(x @ w1 + b1, 0.0)
    ref32 = jnp.maximum(ref32 @ w2 + b2, 0.0)
    ref32 = ref32 @ w3 + b3
    np.testing.assert_allclose(np.asarray(out), np.asarray(ref32), rtol=6e-2, atol=6e-2)

    print("KERNEL_OK")
</pallas_src>

<mosaic_0001>
module attributes {stable_mosaic.version = 11 : i64} {
  func.func @mlp_kernel(%arg0: i32, %arg1: memref<8x90xf32, #tpu.memory_space<vmem>>, %arg2: memref<90x256xbf16, #tpu.memory_space<vmem>>, %arg3: memref<1x256xf32, #tpu.memory_space<vmem>>, %arg4: memref<256x256xbf16, #tpu.memory_space<vmem>>, %arg5: memref<1x256xf32, #tpu.memory_space<vmem>>, %arg6: memref<256x128xbf16, #tpu.memory_space<vmem>>, %arg7: memref<1x128xf32, #tpu.memory_space<vmem>>, %arg8: memref<8x128xf32, #tpu.memory_space<vmem>>) attributes {dimension_semantics = [#tpu.dimension_semantics<parallel>], iteration_bounds = array<i64: 1>, scalar_prefetch = 0 : i64, scratch_operands = 0 : i64, tpu.core_type = #tpu.core_type<tc>, window_params = [{transform_indices = @transform_0, window_bounds = array<i64: 8, 90>}, {pipeline_mode = #tpu.pipeline_mode<synchronous>, transform_indices = @transform_1, window_bounds = array<i64: 90, 256>}, {pipeline_mode = #tpu.pipeline_mode<synchronous>, transform_indices = @transform_2, window_bounds = array<i64: 1, 256>}, {pipeline_mode = #tpu.pipeline_mode<synchronous>, transform_indices = @transform_3, window_bounds = array<i64: 256, 256>}, {pipeline_mode = #tpu.pipeline_mode<synchronous>, transform_indices = @transform_4, window_bounds = array<i64: 1, 256>}, {pipeline_mode = #tpu.pipeline_mode<synchronous>, transform_indices = @transform_5, window_bounds = array<i64: 256, 128>}, {pipeline_mode = #tpu.pipeline_mode<synchronous>, transform_indices = @transform_6, window_bounds = array<i64: 1, 128>}, {transform_indices = @transform_7, window_bounds = array<i64: 8, 128>}]} {
    %c0 = arith.constant 0 : index
    %c0_0 = arith.constant 0 : index
    %0 = vector.load %arg1[%c0, %c0_0] : memref<8x90xf32, #tpu.memory_space<vmem>>, vector<8x90xf32>
    %1 = arith.truncf %0 : vector<8x90xf32> to vector<8x90xbf16>
    %c0_1 = arith.constant 0 : index
    %c0_2 = arith.constant 0 : index
    %2 = vector.load %arg2[%c0_1, %c0_2] : memref<90x256xbf16, #tpu.memory_space<vmem>>, vector<90x256xbf16>
    %cst = arith.constant dense<0.000000e+00> : vector<8x256xf32>
    %3 = tpu.matmul %1, %2, %cst {dimension_numbers = #tpu.dot_dimension_numbers<[1], [0], [0], [1], [0, 0, 1, 1], [], []>} : vector<8x90xbf16>, vector<90x256xbf16>, vector<8x256xf32> -> vector<8x256xf32>
    %c0_3 = arith.constant 0 : index
    %c0_4 = arith.constant 0 : index
    %4 = vector.load %arg3[%c0_3, %c0_4] : memref<1x256xf32, #tpu.memory_space<vmem>>, vector<1x256xf32>
    %5 = vector.broadcast %4 : vector<1x256xf32> to vector<8x256xf32>
    %6 = arith.addf %3, %5 : vector<8x256xf32>
    %cst_5 = arith.constant 0.000000e+00 : f32
    %7 = vector.broadcast %cst_5 : f32 to vector<8x256xf32>
    %8 = arith.maximumf %6, %7 : vector<8x256xf32>
    %9 = arith.truncf %8 : vector<8x256xf32> to vector<8x256xbf16>
    %c0_6 = arith.constant 0 : index
    %c0_7 = arith.constant 0 : index
    %10 = vector.load %arg4[%c0_6, %c0_7] : memref<256x256xbf16, #tpu.memory_space<vmem>>, vector<256x256xbf16>
    %cst_8 = arith.constant dense<0.000000e+00> : vector<8x256xf32>
    %11 = tpu.matmul %9, %10, %cst_8 {dimension_numbers = #tpu.dot_dimension_numbers<[1], [0], [0], [1], [0, 0, 1, 1], [], []>} : vector<8x256xbf16>, vector<256x256xbf16>, vector<8x256xf32> -> vector<8x256xf32>
    %c0_9 = arith.constant 0 : index
    %c0_10 = arith.constant 0 : index
    %12 = vector.load %arg5[%c0_9, %c0_10] : memref<1x256xf32, #tpu.memory_space<vmem>>, vector<1x256xf32>
    %13 = vector.broadcast %12 : vector<1x256xf32> to vector<8x256xf32>
    %14 = arith.addf %11, %13 : vector<8x256xf32>
    %cst_11 = arith.constant 0.000000e+00 : f32
    %15 = vector.broadcast %cst_11 : f32 to vector<8x256xf32>
    %16 = arith.maximumf %14, %15 : vector<8x256xf32>
    %17 = arith.truncf %16 : vector<8x256xf32> to vector<8x256xbf16>
    %c0_12 = arith.constant 0 : index
    %c0_13 = arith.constant 0 : index
    %18 = vector.load %arg6[%c0_12, %c0_13] : memref<256x128xbf16, #tpu.memory_space<vmem>>, vector<256x128xbf16>
    %cst_14 = arith.constant dense<0.000000e+00> : vector<8x128xf32>
    %19 = tpu.matmul %17, %18, %cst_14 {dimension_numbers = #tpu.dot_dimension_numbers<[1], [0], [0], [1], [0, 0, 1, 1], [], []>} : vector<8x256xbf16>, vector<256x128xbf16>, vector<8x128xf32> -> vector<8x128xf32>
    %c0_15 = arith.constant 0 : index
    %c0_16 = arith.constant 0 : index
    %20 = vector.load %arg7[%c0_15, %c0_16] : memref<1x128xf32, #tpu.memory_space<vmem>>, vector<1x128xf32>
    %21 = vector.broadcast %20 : vector<1x128xf32> to vector<8x128xf32>
    %22 = arith.addf %19, %21 : vector<8x128xf32>
    %c0_17 = arith.constant 0 : index
    %c0_18 = arith.constant 0 : index
    %23 = vector.load %arg8[%c0_17, %c0_18] : memref<8x128xf32, #tpu.memory_space<vmem>>, vector<8x128xf32>
    tpu.vector_store %arg8[%c0_17, %c0_18], %22 {strides = array<i32>} : memref<8x128xf32, #tpu.memory_space<vmem>>, vector<8x128xf32>,
    return
  }
  func.func @transform_0(%arg0: i32) -> (i32, i32) {
    %c0_i32 = arith.constant 0 : i32
    %c0_i32_0 = arith.constant 0 : i32
    return %arg0, %c0_i32 : i32, i32
  }
  func.func @transform_1(%arg0: i32) -> (i32, i32) {
    %c0_i32 = arith.constant 0 : i32
    %c0_i32_0 = arith.constant 0 : i32
    %c0_i32_1 = arith.constant 0 : i32
    return %c0_i32, %c0_i32_0 : i32, i32
  }
  func.func @transform_2(%arg0: i32) -> (i32, i32) {
    %c0_i32 = arith.constant 0 : i32
    %c0_i32_0 = arith.constant 0 : i32
    %c0_i32_1 = arith.constant 0 : i32
    return %c0_i32, %c0_i32_0 : i32, i32
  }
  func.func @transform_3(%arg0: i32) -> (i32, i32) {
    %c0_i32 = arith.constant 0 : i32
    %c0_i32_0 = arith.constant 0 : i32
    %c0_i32_1 = arith.constant 0 : i32
    return %c0_i32, %c0_i32_0 : i32, i32
  }
  func.func @transform_4(%arg0: i32) -> (i32, i32) {
    %c0_i32 = arith.constant 0 : i32
    %c0_i32_0 = arith.constant 0 : i32
    %c0_i32_1 = arith.constant 0 : i32
    return %c0_i32, %c0_i32_0 : i32, i32
  }
  func.func @transform_5(%arg0: i32) -> (i32, i32) {
    %c0_i32 = arith.constant 0 : i32
    %c0_i32_0 = arith.constant 0 : i32
    %c0_i32_1 = arith.constant 0 : i32
    return %c0_i32, %c0_i32_0 : i32, i32
  }
  func.func @transform_6(%arg0: i32) -> (i32, i32) {
    %c0_i32 = arith.constant 0 : i32
    %c0_i32_0 = arith.constant 0 : i32
    %c0_i32_1 = arith.constant 0 : i32
    return %c0_i32, %c0_i32_0 : i32, i32
  }
  func.func @transform_7(%arg0: i32) -> (i32, i32) {
    %c0_i32 = arith.constant 0 : i32
    %c0_i32_0 = arith.constant 0 : i32
    return %arg0, %c0_i32 : i32, i32
  }
}

</mosaic_0001>

<llo_original>
// kernel: model_2_forward.1
$region0: #{model_2_forward.1}
  #allocation0 [shape = 'u32[]', space=smem, size = 0x4, offset = 0x4, fixed_abs, tag = 'smem constant byte address 0x4 - core index']
  #allocation1 [shape = 'u32[144,128]{1,0:T(1,128)}', space=vmem, size = 0x12000, scoped, tag = 'internal scratch']
  %s0 = inlined_call_operand.hbm [shape: f32[8,90], index: 0, kind: input, shape index: {}]
  %s1 = inlined_call_operand.hbm [shape: bf16[90,256], index: 1, kind: input, shape index: {}]
  %s2 = inlined_call_operand.vmem [shape: f32[1,256], index: 2, kind: input, shape index: {}]
  %s3 = inlined_call_operand.hbm [shape: bf16[256,256], index: 3, kind: input, shape index: {}]
  %s4 = inlined_call_operand.vmem [shape: f32[1,256], index: 4, kind: input, shape index: {}]
  %s5 = inlined_call_operand.hbm [shape: bf16[256,128], index: 5, kind: input, shape index: {}]
  %s6 = inlined_call_operand.vmem [shape: f32[1,128], index: 6, kind: input, shape index: {}]
  %s7 = inlined_call_operand.hbm [shape: f32[8,128], index: 7, kind: output, shape index: {}]
  %s8 = sld [smem:[#allocation0]]
  $region54: #{model_2_forward.1} parent=0
    _
  %s10 = ssub.s32 1, %s8
  %s11 = scalar_select 0, %s10, %s8
  $region1: #{model_2_forward.1} parent=0
    #allocation2 [shape = 'u8[4096]{0}', space=vmem, size = 0x1000, scoped, tag = 'input window, operand 0, single buffered']
    #allocation3 [shape = 's32[1]{0}', space=sflag, size = 0x4, scoped, tag = 'scoped memory for model_2_forward.1']
    #allocation4 [shape = 's32[1]{0}', space=sflag, size = 0x4, scoped, tag = 'scoped memory for model_2_forward.1']
    #allocation5 [shape = 'u8[49152]{0}', space=vmem, size = 0xc000, scoped, tag = 'input window, operand 1, single buffered']
    #allocation6 [shape = 's32[1]{0}', space=sflag, size = 0x4, scoped, tag = 'scoped memory for model_2_forward.1']
    #allocation7 [shape = 'u8[131072]{0}', space=vmem, size = 0x20000, scoped, tag = 'input window, operand 3, single buffered']
    #allocation8 [shape = 'u8[65536]{0}', space=vmem, size = 0x10000, scoped, tag = 'input window, operand 5, single buffered']
    #allocation9 [shape = 's32[1]{0}', space=sflag, size = 0x4, scoped, tag = 'scoped memory for model_2_forward.1']
    #allocation10 [shape = 'u8[4096]{0}', space=vmem, size = 0x1000, scoped, tag = 'output window, operand 0, single buffered']
    %12 = vsyncpa [#allocation3], 0
    %13 = vsyncpa [#allocation6], 0
    %14 = vsyncpa [#allocation9], 0
    %15 = vsyncpa [#allocation4], 0
    // Predicated region
    $region2: #{model_2_forward.1} parent=1 // pred_check
      _
    $region3: #{model_2_forward.1} parent=1 // pred_check_branch
      %17 = sbr.rel (0) target = $region5
    $region4: #{model_2_forward.1} parent=1 // pred_region
      %s19 = ssub.s32 128, 128
      %20 = vsyncadd [#allocation3], %s19
      %s22 = sshll.u32 [#allocation2], 4
      %s23 = int_to_ptr.vmem [resolvable:$true] %s22
      %25 = dma.hbm_to_vmem [thread:$0]  %s0, 128, %s23, [#allocation3]
    $region5: #{model_2_forward.1} parent=1 // pred_fallthru
      _
    // Predicated region
    $region6: #{model_2_forward.1} parent=1 // pred_check
      _
    $region7: #{model_2_forward.1} parent=1 // pred_check_branch
      %27 = sbr.rel (0) target = $region9
    $region8: #{model_2_forward.1} parent=1 // pred_region
      %s29 = ssub.s32 1536, 1536
      %30 = vsyncadd [#allocation6], %s29
      %s31 = sshll.u32 [#allocation5], 4
      %s32 = int_to_ptr.vmem [resolvable:$true] %s31
      %37 = dma.hbm_to_vmem [thread:$0]  %s1, 1536, %s32, [#allocation6], 128, 128, 8
    $region9: #{model_2_forward.1} parent=1 // pred_fallthru
      _
    // Predicated region
    $region10: #{model_2_forward.1} parent=1 // pred_check
      _
    $region11: #{model_2_forward.1} parent=1 // pred_check_branch
      %39 = sbr.rel (0) target = $region13
    $region12: #{model_2_forward.1} parent=1 // pred_region
      _
    $region13: #{model_2_forward.1} parent=1 // pred_fallthru
      _
    // Predicated region
    $region14: #{model_2_forward.1} parent=1 // pred_check
      _
    $region15: #{model_2_forward.1} parent=1 // pred_check_branch
      %41 = sbr.rel (0) target = $region17
    $region16: #{model_2_forward.1} parent=1 // pred_region
      %s43 = ssub.s32 4096, 4096
      %44 = vsyncadd [#allocation6], %s43
      %s45 = sshll.u32 [#allocation7], 4
      %s46 = int_to_ptr.vmem [resolvable:$true] %s45
      %51 = dma.hbm_to_vmem [thread:$0]  %s3, 4096, %s46, [#allocation6], 128, 128, 8
    $region17: #{model_2_forward.1} parent=1 // pred_fallthru
      _
    // Predicated region
    $region18: #{model_2_forward.1} parent=1 // pred_check
      _
    $region19: #{model_2_forward.1} parent=1 // pred_check_branch
      %53 = sbr.rel (0) target = $region21
    $region20: #{model_2_forward.1} parent=1 // pred_region
      _
    $region21: #{model_2_forward.1} parent=1 // pred_fallthru
      _
    // Predicated region
    $region22: #{model_2_forward.1} parent=1 // pred_check
      _
    $region23: #{model_2_forward.1} parent=1 // pred_check_branch
      %55 = sbr.rel (0) target = $region25
    $region24: #{model_2_forward.1} parent=1 // pred_region
      %s57 = ssub.s32 2048, 2048
      %58 = vsyncadd [#allocation9], %s57
      %s59 = sshll.u32 [#allocation8], 4
      %s60 = int_to_ptr.vmem [resolvable:$true] %s59
      %65 = dma.hbm_to_vmem [thread:$0]  %s5, 2048, %s60, [#allocation9], 64, 64, 4
    $region25: #{model_2_forward.1} parent=1 // pred_fallthru
      _
    // Predicated region
    $region26: #{model_2_forward.1} parent=1 // pred_check
      _
    $region27: #{model_2_forward.1} parent=1 // pred_check_branch
      %67 = sbr.rel (0) target = $region29
    $region28: #{model_2_forward.1} parent=1 // pred_region
      _
    $region29: #{model_2_forward.1} parent=1 // pred_fallthru
      _
    // Predicated region
    $region30: #{model_2_forward.1} parent=1 // pred_check
      _
    $region31: #{model_2_forward.1} parent=1 // pred_check_branch
      %69 = sbr.rel (0) target = $region33
    $region32: #{model_2_forward.1} parent=1 // pred_region
      %70 = dma.done [#allocation3], 128
    $region33: #{model_2_forward.1} parent=1 // pred_fallthru
      _
    // Predicated region
    $region34: #{model_2_forward.1} parent=1 // pred_check
      _
    $region35: #{model_2_forward.1} parent=1 // pred_check_branch
      %72 = sbr.rel (0) target = $region37
    $region36: #{model_2_forward.1} parent=1 // pred_region
      %73 = dma.done [#allocation6], 1536
    $region37: #{model_2_forward.1} parent=1 // pred_fallthru
      _
    // Predicated region
    $region38: #{model_2_forward.1} parent=1 // pred_check
      _
    $region39: #{model_2_forward.1} parent=1 // pred_check_branch
      %75 = sbr.rel (0) target = $region41
    $region40: #{model_2_forward.1} parent=1 // pred_region
      %76 = dma.done [#allocation6], 4096
    $region41: #{model_2_forward.1} parent=1 // pred_fallthru
      _
    // Predicated region
    $region42: #{model_2_forward.1} parent=1 // pred_check
      _
    $region43: #{model_2_forward.1} parent=1 // pred_check_branch
      %78 = sbr.rel (0) target = $region45
    $region44: #{model_2_forward.1} parent=1 // pred_region
      %79 = dma.done [#allocation9], 2048
    $region45: #{model_2_forward.1} parent=1 // pred_fallthru
      _
    %v81 = vld [vmem:[#allocation2] sm:$0xff]
    %v82 = vpack.c.bf16 %v81, %v81
    %v83 = vld [vmem:[#allocation5] sm:$0xff]
    %v84 = vld [vmem:[#allocation5 + $0x8] sm:$0xff]
    %v85 = vld [vmem:[#allocation5 + $0x10] sm:$0xff]
    %v86 = vld [vmem:[#allocation5 + $0x18] sm:$0xff]
    %v87 = vld [vmem:[#allocation5 + $0x20] sm:$0xff]
    %v88 = vld [vmem:[#allocation5 + $0x28] sm:$0xff]
    %v89 = vld [vmem:[#allocation5 + $0x30] sm:$0xff]
    %v90 = vld [vmem:[#allocation5 + $0x38] sm:$0xff]
    %v91 = vld [vmem:[#allocation5 + $0x40] sm:$0xff]
    %v92 = vld [vmem:[#allocation5 + $0x48] sm:$0xff]
    %v93 = vld [vmem:[#allocation5 + $0x50] sm:$0xff]
    %v94 = vld [vmem:[#allocation5 + $0x58] sm:$0x11]
    %v95 = vld [vmem:[%s2] sm:$0x3]
    %v97 = vlaneseq
    %v98 = vshrl.u32 %v97, 7
    %v99 = vsub.s32 0, %v98
    %v100 = vrot.slane %v95, %v99
    %v101 = vlaneseq
    %v102 = vshrl.u32 %v101, 7
    %v103 = vsub.s32 1, %v102
    %v104 = vrot.slane %v95, %v103
    %v119 = vunpack.c.l.b16 %v83
    %v120 = vunpack.c.h.b16 %v83
    %v121 = vunpack.c.l.b16 %v84
    %v122 = vunpack.c.h.b16 %v84
    %v123 = vunpack.c.l.b16 %v85
    %v124 = vunpack.c.h.b16 %v85
    %v125 = vunpack.c.l.b16 %v86
    %v126 = vunpack.c.h.b16 %v86
    %v127 = vunpack.c.l.b16 %v87
    %v128 = vunpack.c.h.b16 %v87
    %v129 = vunpack.c.l.b16 %v88
    %v130 = vunpack.c.h.b16 %v88
    %v131 = vunpack.c.l.b16 %v89
    %v132 = vunpack.c.h.b16 %v89
    %v133 = vunpack.c.l.b16 %v90
    %v134 = vunpack.c.h.b16 %v90
    %v135 = vunpack.c.l.b16 %v91
    %v136 = vunpack.c.h.b16 %v91
    %v137 = vunpack.c.l.b16 %v92
    %v138 = vunpack.c.h.b16 %v92
    %v139 = vunpack.c.l.b16 %v93
    %v140 = vunpack.c.h.b16 %v93
    %v141 = vunpack.c.l.b16 %v94
    %v142 = vunpack.c.h.b16 %v94
    %v143 = vpack.c.b16 %v121, %v119
    %v144 = vpack.c.b16 %v122, %v120
    %v145 = vpack.c.b16 %v125, %v123
    %v146 = vpack.c.b16 %v126, %v124
    %v147 = vpack.c.b16 %v129, %v127
    %v148 = vpack.c.b16 %v130, %v128
    %v149 = vpack.c.b16 %v133, %v131
    %v150 = vpack.c.b16 %v134, %v132
    %v151 = vpack.c.b16 %v137, %v135
    %v152 = vpack.c.b16 %v138, %v136
    %v153 = vpack.c.b16 %v141, %v139
    %v154 = vpack.c.b16 %v142, %v140
    %vm165 = vcmask 736256
    %v167 = vsel %vm165, %v82, 0
    %vm169 = vcmask 1044480
    %v171 = vsel %vm169, %v153, 0
    %v174 = vsel %vm169, %v154, 0
    %176 = vmatprep.subr.bf16.mxu0 %v144
    %177 = vmatpush1.bf16.msra.mxu0 %v143
    %178 = vmatprep.subr.bf16.mxu0 %v146
    %179 = vmatpush1.bf16.msra.mxu0 %v145
    %180 = vmatprep.subr.bf16.mxu0 %v148
    %181 = vmatpush1.bf16.msra.mxu0 %v147
    %182 = vmatprep.subr.bf16.mxu0 %v150
    %183 = vmatpush1.bf16.msra.mxu0 %v149
    %184 = vmatprep.subr.bf16.mxu0 %v152
    %185 = vmatpush1.bf16.msra.mxu0 %v151
    %186 = vmatprep.subr.bf16.mxu0 %v174
    %187 = vmatpush1.bf16.msra.mxu0 %v171
    %188 = vmatprep.subr.bf16.mxu0 0
    %189 = vmatpush1.bf16.msra.mxu0 0
    %190 = vmatprep.subr.bf16.mxu0 0
    %191 = vmatpush1.bf16.msra.mxu0 0
    %192 = vmatprep.subr.bf16.mxu0 0
    %193 = vmatpush1.bf16.msra.mxu0 0
    %194 = vmatprep.subr.bf16.mxu0 0
    %195 = vmatpush1.bf16.msra.mxu0 0
    %196 = vmatprep.subr.bf16.mxu0 0
    %197 = vmatpush1.bf16.msra.mxu0 0
    %198 = vmatprep.subr.bf16.mxu0 0
    %199 = vmatpush1.bf16.msra.mxu0 0
    %200 = vmatprep.subr.bf16.mxu0 0
    %201 = vmatpush1.bf16.msra.mxu0 0
    %202 = vmatprep.subr.bf16.mxu0 0
    %203 = vmatpush1.bf16.msra.mxu0 0
    %204 = vmatprep.subr.bf16.mxu0 0
    %205 = vmatpush1.bf16.msra.mxu0 0
    %206 = vmatprep.subr.bf16.mxu0 0
    %207 = vmatpush1.bf16.msra.mxu0 0
    %208 = vmatprep.mubr.bf16.mxu0 0
    %209 = vmatmul.mubr.bf16.gmra.mrb[0].mxu0 %v167
    %v210 = vpop.f32.mrb[0].mxu0
    %v211 = vadd.f32 %v100, %v210
    %v212 = vpop.f32.mrb[0].mxu0
    %v213 = vadd.f32 %v104, %v212
    %v214 = vpop.f32.mrb[0].mxu0
    %v215 = vpop.f32.mrb[0].mxu0
    %216 = vdwg.mxu0
    %v217 = vmax.f32 %v211, 0.0
    %v218 = vmax.f32 %v213, 0.0
    %v219 = vpack.c.bf16 %v217, %v217
    %v220 = vpack.c.bf16 %v218, %v218
    %v221 = vld [vmem:[#allocation7] sm:$0xff]
    %v222 = vld [vmem:[#allocation7 + $0x8] sm:$0xff]
    %v223 = vld [vmem:[#allocation7 + $0x10] sm:$0xff]
    %v224 = vld [vmem:[#allocation7 + $0x18] sm:$0xff]
    %v225 = vld [vmem:[#allocation7 + $0x20] sm:$0xff]
    %v226 = vld [vmem:[#allocation7 + $0x28] sm:$0xff]
    %v227 = vld [vmem:[#allocation7 + $0x30] sm:$0xff]
    %v228 = vld [vmem:[#allocation7 + $0x38] sm:$0xff]
    %v229 = vld [vmem:[#allocation7 + $0x40] sm:$0xff]
    %v230 = vld [vmem:[#allocation7 + $0x48] sm:$0xff]
    %v231 = vld [vmem:[#allocation7 + $0x50] sm:$0xff]
    %v232 = vld [vmem:[#allocation7 + $0x58] sm:$0xff]
    %v233 = vld [vmem:[#allocation7 + $0x60] sm:$0xff]
    %v234 = vld [vmem:[#allocation7 + $0x68] sm:$0xff]
    %v235 = vld [vmem:[#allocation7 + $0x70] sm:$0xff]
    %v236 = vld [vmem:[#allocation7 + $0x78] sm:$0xff]
    %v237 = vld [vmem:[#allocation7 + $0x80] sm:$0xff]
    %v238 = vld [vmem:[#allocation7 + $0x88] sm:$0xff]
    %v239 = vld [vmem:[#allocation7 + $0x90] sm:$0xff]
    %v240 = vld [vmem:[#allocation7 + $0x98] sm:$0xff]
    %v241 = vld [vmem:[#allocation7 + $0xa0] sm:$0xff]
    %v242 = vld [vmem:[#allocation7 + $0xa8] sm:$0xff]
    %v243 = vld [vmem:[#allocation7 + $0xb0] sm:$0xff]
    %v244 = vld [vmem:[#allocation7 + $0xb8] sm:$0xff]
    %v245 = vld [vmem:[#allocation7 + $0xc0] sm:$0xff]
    %v246 = vld [vmem:[#allocation7 + $0xc8] sm:$0xff]
    %v247 = vld [vmem:[#allocation7 + $0xd0] sm:$0xff]
    %v248 = vld [vmem:[#allocation7 + $0xd8] sm:$0xff]
    %v249 = vld [vmem:[#allocation7 + $0xe0] sm:$0xff]
    %v250 = vld [vmem:[#allocation7 + $0xe8] sm:$0xff]
    %v251 = vld [vmem:[#allocation7 + $0xf0] sm:$0xff]
    %v252 = vld [vmem:[#allocation7 + $0xf8] sm:$0xff]
    %v253 = vld [vmem:[%s4] sm:$0x3]
    %v255 = vlaneseq
    %v256 = vshrl.u32 %v255, 7
    %v257 = vsub.s32 0, %v256
    %v258 = vrot.slane %v253, %v257
    %v259 = vlaneseq
    %v260 = vshrl.u32 %v259, 7
    %v261 = vsub.s32 1, %v260
    %v262 = vrot.slane %v253, %v261
    %v297 = vunpack.c.l.b16 %v221
    %v298 = vunpack.c.h.b16 %v221
    %v299 = vunpack.c.l.b16 %v222
    %v300 = vunpack.c.h.b16 %v222
    %v301 = vunpack.c.l.b16 %v223
    %v302 = vunpack.c.h.b16 %v223
    %v303 = vunpack.c.l.b16 %v224
    %v304 = vunpack.c.h.b16 %v224
    %v305 = vunpack.c.l.b16 %v225
    %v306 = vunpack.c.h.b16 %v225
    %v307 = vunpack.c.l.b16 %v226
    %v308 = vunpack.c.h.b16 %v226
    %v309 = vunpack.c.l.b16 %v227
    %v310 = vunpack.c.h.b16 %v227
    %v311 = vunpack.c.l.b16 %v228
    %v312 = vunpack.c.h.b16 %v228
    %v313 = vunpack.c.l.b16 %v229
    %v314 = vunpack.c.h.b16 %v229
    %v315 = vunpack.c.l.b16 %v230
    %v316 = vunpack.c.h.b16 %v230
    %v317 = vunpack.c.l.b16 %v231
    %v318 = vunpack.c.h.b16 %v231
    %v319 = vunpack.c.l.b16 %v232
    %v320 = vunpack.c.h.b16 %v232
    %v321 = vunpack.c.l.b16 %v233
    %v322 = vunpack.c.h.b16 %v233
    %v323 = vunpack.c.l.b16 %v234
    %v324 = vunpack.c.h.b16 %v234
    %v325 = vunpack.c.l.b16 %v235
    %v326 = vunpack.c.h.b16 %v235
    %v327 = vunpack.c.l.b16 %v236
    %v328 = vunpack.c.h.b16 %v236
    %v329 = vunpack.c.l.b16 %v237
    %v330 = vunpack.c.h.b16 %v237
    %v331 = vunpack.c.l.b16 %v238
    %v332 = vunpack.c.h.b16 %v238
    %v333 = vunpack.c.l.b16 %v239
    %v334 = vunpack.c.h.b16 %v239
    %v335 = vunpack.c.l.b16 %v240
    %v336 = vunpack.c.h.b16 %v240
    %v337 = vunpack.c.l.b16 %v241
    %v338 = vunpack.c.h.b16 %v241
    %v339 = vunpack.c.l.b16 %v242
    %v340 = vunpack.c.h.b16 %v242
    %v341 = vunpack.c.l.b16 %v243
    %v342 = vunpack.c.h.b16 %v243
    %v343 = vunpack.c.l.b16 %v244
    %v344 = vunpack.c.h.b16 %v244
    %v345 = vunpack.c.l.b16 %v245
    %v346 = vunpack.c.h.b16 %v245
    %v347 = vunpack.c.l.b16 %v246
    %v348 = vunpack.c.h.b16 %v246
    %v349 = vunpack.c.l.b16 %v247
    %v350 = vunpack.c.h.b16 %v247
    %v351 = vunpack.c.l.b16 %v248
    %v352 = vunpack.c.h.b16 %v248
    %v353 = vunpack.c.l.b16 %v249
    %v354 = vunpack.c.h.b16 %v249
    %v355 = vunpack.c.l.b16 %v250
    %v356 = vunpack.c.h.b16 %v250
    %v357 = vunpack.c.l.b16 %v251
    %v358 = vunpack.c.h.b16 %v251
    %v359 = vunpack.c.l.b16 %v252
    %v360 = vunpack.c.h.b16 %v252
    %v361 = vpack.c.b16 %v299, %v297
    %v362 = vpack.c.b16 %v300, %v298
    %v363 = vpack.c.b16 %v303, %v301
    %v364 = vpack.c.b16 %v304, %v302
    %v365 = vpack.c.b16 %v307, %v305
    %v366 = vpack.c.b16 %v308, %v306
    %v367 = vpack.c.b16 %v311, %v309
    %v368 = vpack.c.b16 %v312, %v310
    %v369 = vpack.c.b16 %v315, %v313
    %v370 = vpack.c.b16 %v316, %v314
    %v371 = vpack.c.b16 %v319, %v317
    %v372 = vpack.c.b16 %v320, %v318
    %v373 = vpack.c.b16 %v323, %v321
    %v374 = vpack.c.b16 %v324, %v322
    %v375 = vpack.c.b16 %v327, %v325
    %v376 = vpack.c.b16 %v328, %v326
    %v377 = vpack.c.b16 %v331, %v329
    %v378 = vpack.c.b16 %v332, %v330
    %v379 = vpack.c.b16 %v335, %v333
    %v380 = vpack.c.b16 %v336, %v334
    %v381 = vpack.c.b16 %v339, %v337
    %v382 = vpack.c.b16 %v340, %v338
    %v383 = vpack.c.b16 %v343, %v341
    %v384 = vpack.c.b16 %v344, %v342
    %v385 = vpack.c.b16 %v347, %v345
    %v386 = vpack.c.b16 %v348, %v346
    %v387 = vpack.c.b16 %v351, %v349
    %v388 = vpack.c.b16 %v352, %v350
    %v389 = vpack.c.b16 %v355, %v353
    %v390 = vpack.c.b16 %v356, %v354
    %v391 = vpack.c.b16 %v359, %v357
    %v392 = vpack.c.b16 %v360, %v358
    %425 = vmatprep.subr.bf16.mxu0 %v362
    %426 = vmatpush1.bf16.msra.mxu0 %v361
    %427 = vmatprep.subr.bf16.mxu0 %v364
    %428 = vmatpush1.bf16.msra.mxu0 %v363
    %429 = vmatprep.subr.bf16.mxu0 %v366
    %430 = vmatpush1.bf16.msra.mxu0 %v365
    %431 = vmatprep.subr.bf16.mxu0 %v368
    %432 = vmatpush1.bf16.msra.mxu0 %v367
    %433 = vmatprep.subr.bf16.mxu0 %v370
    %434 = vmatpush1.bf16.msra.mxu0 %v369
    %435 = vmatprep.subr.bf16.mxu0 %v372
    %436 = vmatpush1.bf16.msra.mxu0 %v371
    %437 = vmatprep.subr.bf16.mxu0 %v374
    %438 = vmatpush1.bf16.msra.mxu0 %v373
    %439 = vmatprep.subr.bf16.mxu0 %v376
    %440 = vmatpush1.bf16.msra.mxu0 %v375
    %441 = vmatprep.subr.bf16.mxu0 %v378
    %442 = vmatpush1.bf16.msra.mxu0 %v377
    %443 = vmatprep.subr.bf16.mxu0 %v380
    %444 = vmatpush1.bf16.msra.mxu0 %v379
    %445 = vmatprep.subr.bf16.mxu0 %v382
    %446 = vmatpush1.bf16.msra.mxu0 %v381
    %447 = vmatprep.subr.bf16.mxu0 %v384
    %448 = vmatpush1.bf16.msra.mxu0 %v383
    %449 = vmatprep.subr.bf16.mxu0 %v386
    %450 = vmatpush1.bf16.msra.mxu0 %v385
    %451 = vmatprep.subr.bf16.mxu0 %v388
    %452 = vmatpush1.bf16.msra.mxu0 %v387
    %453 = vmatprep.subr.bf16.mxu0 %v390
    %454 = vmatpush1.bf16.msra.mxu0 %v389
    %455 = vmatprep.subr.bf16.mxu0 %v392
    %456 = vmatpush1.bf16.msra.mxu0 %v391
    %457 = vmatprep.mubr.bf16.mxu0 %v220
    %458 = vmatmul.mubr.bf16.gmra.mrb[0].mxu0 %v219
    %v459 = vpop.f32.mrb[0].mxu0
    %v460 = vadd.f32 %v258, %v459
    %v461 = vpop.f32.mrb[0].mxu0
    %v462 = vadd.f32 %v262, %v461
    %v463 = vpop.f32.mrb[0].mxu0
    %v464 = vpop.f32.mrb[0].mxu0
    %465 = vdwg.mxu0
    %v466 = vmax.f32 %v460, 0.0
    %v467 = vmax.f32 %v462, 0.0
    %v468 = vpack.c.bf16 %v466, %v466
    %v469 = vpack.c.bf16 %v467, %v467
    %v470 = vld [vmem:[#allocation8] sm:$0xf]
    %v471 = vld [vmem:[#allocation8 + $0x4] sm:$0xf]
    %v472 = vld [vmem:[#allocation8 + $0x8] sm:$0xf]
    %v473 = vld [vmem:[#allocation8 + $0xc] sm:$0xf]
    %v474 = vld [vmem:[#allocation8 + $0x10] sm:$0xf]
    %v475 = vld [vmem:[#allocation8 + $0x14] sm:$0xf]
    %v476 = vld [vmem:[#allocation8 + $0x18] sm:$0xf]
    %v477 = vld [vmem:[#allocation8 + $0x1c] sm:$0xf]
    %v478 = vld [vmem:[#allocation8 + $0x20] sm:$0xf]
    %v479 = vld [vmem:[#allocation8 + $0x24] sm:$0xf]
    %v480 = vld [vmem:[#allocation8 + $0x28] sm:$0xf]
    %v481 = vld [vmem:[#allocation8 + $0x2c] sm:$0xf]
    %v482 = vld [vmem:[#allocation8 + $0x30] sm:$0xf]
    %v483 = vld [vmem:[#allocation8 + $0x34] sm:$0xf]
    %v484 = vld [vmem:[#allocation8 + $0x38] sm:$0xf]
    %v485 = vld [vmem:[#allocation8 + $0x3c] sm:$0xf]
    %v486 = vld [vmem:[#allocation8 + $0x40] sm:$0xf]
    %v487 = vld [vmem:[#allocation8 + $0x44] sm:$0xf]
    %v488 = vld [vmem:[#allocation8 + $0x48] sm:$0xf]
    %v489 = vld [vmem:[#allocation8 + $0x4c] sm:$0xf]
    %v490 = vld [vmem:[#allocation8 + $0x50] sm:$0xf]
    %v491 = vld [vmem:[#allocation8 + $0x54] sm:$0xf]
    %v492 = vld [vmem:[#allocation8 + $0x58] sm:$0xf]
    %v493 = vld [vmem:[#allocation8 + $0x5c] sm:$0xf]
    %v494 = vld [vmem:[#allocation8 + $0x60] sm:$0xf]
    %v495 = vld [vmem:[#allocation8 + $0x64] sm:$0xf]
    %v496 = vld [vmem:[#allocation8 + $0x68] sm:$0xf]
    %v497 = vld [vmem:[#allocation8 + $0x6c] sm:$0xf]
    %v498 = vld [vmem:[#allocation8 + $0x70] sm:$0xf]
    %v499 = vld [vmem:[#allocation8 + $0x74] sm:$0xf]
    %v500 = vld [vmem:[#allocation8 + $0x78] sm:$0xf]
    %v501 = vld [vmem:[#allocation8 + $0x7c] sm:$0xf]
    %v502 = vld [vmem:[%s6] sm:$0x1]
    %v504 = vlaneseq
    %v505 = vshrl.u32 %v504, 7
    %v506 = vsub.s32 0, %v505
    %v507 = vrot.slane %v502, %v506
    %v541 = vunpack.c.l.b16 %v470
    %v542 = vunpack.c.l.b16 %v471
    %v543 = vunpack.c.l.b16 %v472
    %v544 = vunpack.c.l.b16 %v473
    %v545 = vunpack.c.l.b16 %v474
    %v546 = vunpack.c.l.b16 %v475
    %v547 = vunpack.c.l.b16 %v476
    %v548 = vunpack.c.l.b16 %v477
    %v549 = vunpack.c.l.b16 %v478
    %v550 = vunpack.c.l.b16 %v479
    %v551 = vunpack.c.l.b16 %v480
    %v552 = vunpack.c.l.b16 %v481
    %v553 = vunpack.c.l.b16 %v482
    %v554 = vunpack.c.l.b16 %v483
    %v555 = vunpack.c.l.b16 %v484
    %v556 = vunpack.c.l.b16 %v485
    %v557 = vunpack.c.l.b16 %v486
    %v558 = vunpack.c.l.b16 %v487
    %v559 = vunpack.c.l.b16 %v488
    %v560 = vunpack.c.l.b16 %v489
    %v561 = vunpack.c.l.b16 %v490
    %v562 = vunpack.c.l.b16 %v491
    %v563 = vunpack.c.l.b16 %v492
    %v564 = vunpack.c.l.b16 %v493
    %v565 = vunpack.c.l.b16 %v494
    %v566 = vunpack.c.l.b16 %v495
    %v567 = vunpack.c.l.b16 %v496
    %v568 = vunpack.c.l.b16 %v497
    %v569 = vunpack.c.l.b16 %v498
    %v570 = vunpack.c.l.b16 %v499
    %v571 = vunpack.c.l.b16 %v500
    %v572 = vunpack.c.l.b16 %v501
    %v573 = vpack.c.b16 %v542, %v541
    %v574 = vpack.c.b16 %v544, %v543
    %v575 = vpack.c.b16 %v546, %v545
    %v576 = vpack.c.b16 %v548, %v547
    %v577 = vpack.c.b16 %v550, %v549
    %v578 = vpack.c.b16 %v552, %v551
    %v579 = vpack.c.b16 %v554, %v553
    %v580 = vpack.c.b16 %v556, %v555
    %v581 = vpack.c.b16 %v558, %v557
    %v582 = vpack.c.b16 %v560, %v559
    %v583 = vpack.c.b16 %v562, %v561
    %v584 = vpack.c.b16 %v564, %v563
    %v585 = vpack.c.b16 %v566, %v565
    %v586 = vpack.c.b16 %v568, %v567
    %v587 = vpack.c.b16 %v570, %v569
    %v588 = vpack.c.b16 %v572, %v571
    %605 = vmatprep.subr.bf16.mxu0 0
    %606 = vmatpush1.bf16.msra.mxu0 %v573
    %607 = vmatprep.subr.bf16.mxu0 0
    %608 = vmatpush1.bf16.msra.mxu0 %v574
    %609 = vmatprep.subr.bf16.mxu0 0
    %610 = vmatpush1.bf16.msra.mxu0 %v575
    %611 = vmatprep.subr.bf16.mxu0 0
    %612 = vmatpush1.bf16.msra.mxu0 %v576
    %613 = vmatprep.subr.bf16.mxu0 0
    %614 = vmatpush1.bf16.msra.mxu0 %v577
    %615 = vmatprep.subr.bf16.mxu0 0
    %616 = vmatpush1.bf16.msra.mxu0 %v578
    %617 = vmatprep.subr.bf16.mxu0 0
    %618 = vmatpush1.bf16.msra.mxu0 %v579
    %619 = vmatprep.subr.bf16.mxu0 0
    %620 = vmatpush1.bf16.msra.mxu0 %v580
    %621 = vmatprep.subr.bf16.mxu0 0
    %622 = vmatpush1.bf16.msra.mxu0 %v581
    %623 = vmatprep.subr.bf16.mxu0 0
    %624 = vmatpush1.bf16.msra.mxu0 %v582
    %625 = vmatprep.subr.bf16.mxu0 0
    %626 = vmatpush1.bf16.msra.mxu0 %v583
    %627 = vmatprep.subr.bf16.mxu0 0
    %628 = vmatpush1.bf16.msra.mxu0 %v584
    %629 = vmatprep.subr.bf16.mxu0 0
    %630 = vmatpush1.bf16.msra.mxu0 %v585
    %631 = vmatprep.subr.bf16.mxu0 0
    %632 = vmatpush1.bf16.msra.mxu0 %v586
    %633 = vmatprep.subr.bf16.mxu0 0
    %634 = vmatpush1.bf16.msra.mxu0 %v587
    %635 = vmatprep.subr.bf16.mxu0 0
    %636 = vmatpush1.bf16.msra.mxu0 %v588
    %637 = vmatprep.mubr.bf16.mxu0 %v469
    %638 = vmatmul.mubr.bf16.gmra.mrb[0].mxu0 %v468
    %v639 = vpop.f32.mrb[0].mxu0
    %v640 = vadd.f32 %v507, %v639
    %v641 = vpop.f32.mrb[0].mxu0
    %v642 = vpop.f32.mrb[0].mxu0
    %v643 = vpop.f32.mrb[0].mxu0
    %644 = vdwg.mxu0
    %645 = vst [vmem:[#allocation10] sm:$0xff] %v640
    // Predicated region
    $region46: #{model_2_forward.1} parent=1 // pred_check
      _
    $region47: #{model_2_forward.1} parent=1 // pred_check_branch
      %647 = sbr.rel (0) target = $region49
    $region48: #{model_2_forward.1} parent=1 // pred_region
      %s649 = ssub.s32 128, 128
      %650 = vsyncadd [#allocation4], %s649
      %s652 = sshll.u32 [#allocation10], 4
      %s653 = int_to_ptr.vmem [resolvable:$true] %s652
      %655 = dma.vmem_to_hbm [thread:$0]  %s653, 128, %s7, [#allocation4]
    $region49: #{model_2_forward.1} parent=1 // pred_fallthru
      _
    // Predicated region
    $region50: #{model_2_forward.1} parent=1 // pred_check
      _
    $region51: #{model_2_forward.1} parent=1 // pred_check_branch
      %657 = sbr.rel (0) target = $region53
    $region52: #{model_2_forward.1} parent=1 // pred_region
      %658 = dma.done [#allocation4], 128
    $region53: #{model_2_forward.1} parent=1 // pred_fallthru
      _
    %659 = vsyncpa [#allocation3], 1
    %660 = vsyncpa [#allocation6], 1
    %661 = vsyncpa [#allocation9], 1
    %662 = vsyncpa [#allocation4], 1

</llo_original>
